<compile_context>
chip_gen: v7x
topology: tpu7x:2x2x1
jax: 0.10.0
libtpu: 0.0.40
codegen_flags: <defaults>
</compile_context>

<pallas_src>
import functools
import math

import jax
import jax.numpy as jnp
from jax import lax
from jax.experimental import pallas as pl
from jax.experimental.pallas import tpu as pltpu


_INV_SQRT2 = 0.7071067811865476


def _round_up(x, m):
    return ((x + m - 1) // m) * m


def _head_transform_kernel(x_ref, w_ref, b_ref, gamma_ref, beta_ref, o_ref, *, eps):
    # Dense: y = x @ W + b.  Operands stay in their native dtype (bf16 MXU
    # path is native); accumulation is f32.
    h = jnp.dot(x_ref[...], w_ref[...], preferred_element_type=jnp.float32)
    h = h + b_ref[...].astype(jnp.float32)

    # Exact erf-GELU (matches PyTorch `gelu`); erf goes to the EUP slot and the
    # divide is replaced by a multiply.
    h = h * (0.5 * (1.0 + lax.erf(h * _INV_SQRT2)))

    # BertLayerNorm: biased variance over the last dim, eps inside the sqrt.
    # Two-pass form for parity with the reference; rsqrt -> EUP.
    u = jnp.mean(h, axis=-1, keepdims=True)
    d = h - u
    s = jnp.mean(d * d, axis=-1, keepdims=True)
    inv = lax.rsqrt(s + eps)
    y = d * inv * gamma_ref[...].astype(jnp.float32) + beta_ref[...].astype(jnp.float32)
    o_ref[...] = y.astype(o_ref.dtype)


def bert_prediction_head_transform(hidden_states, w, b, gamma, beta, *,
                                   eps=1e-5, tm=256):
    """hidden_states: (B, S, H); w: (H_in, H_out); b/gamma/beta: (H,)."""
    B, S, H = hidden_states.shape
    M = B * S
    x2d = hidden_states.reshape(M, H)

    # Row tile: big and MXU-friendly (multiple of 128; default 256), but no
    # larger than the padded token count so small inputs don't over-pad.
    tm_eff = max(8, min(tm, _round_up(M, 128)))
    M_pad = _round_up(M, tm_eff)
    if M_pad != M:
        x2d = jnp.pad(x2d, ((0, M_pad - M), (0, 0)))

    b2d = b.reshape(1, H)
    g2d = gamma.reshape(1, H)
    be2d = beta.reshape(1, H)

    # VMEM budget: double-buffered x/out tiles + the (constant-index but still
    # double-buffered) weight + the small vectors, with ~1 MiB headroom.
    x_bytes = tm_eff * H * x2d.dtype.itemsize
    w_bytes = w.size * w.dtype.itemsize
    vec_bytes = 3 * H * max(b.dtype.itemsize, 4)
    vmem_needed = 2 * (2 * x_bytes) + 2 * w_bytes + 2 * vec_bytes + (1 << 20)
    vmem_limit = int(min(max(vmem_needed, 32 * 1024 * 1024), 64 * 1024 * 1024))

    cost = pl.CostEstimate(
        flops=2 * M_pad * H * H,
        transcendentals=M_pad * H,
        bytes_accessed=(x2d.size * x2d.dtype.itemsize
                        + w_bytes
                        + M_pad * H * hidden_states.dtype.itemsize),
    )

    out2d = pl.pallas_call(
        functools.partial(_head_transform_kernel, eps=eps),
        out_shape=jax.ShapeDtypeStruct((M_pad, H), hidden_states.dtype),
        grid_spec=pltpu.PrefetchScalarGridSpec(
            num_scalar_prefetch=0,
            grid=(M_pad // tm_eff,),
            in_specs=[
                pl.BlockSpec((tm_eff, H), lambda i: (i, 0)),  # x row tile
                pl.BlockSpec((H, H), lambda i: (0, 0)),       # dense weight (resident)
                pl.BlockSpec((1, H), lambda i: (0, 0)),       # dense bias
                pl.BlockSpec((1, H), lambda i: (0, 0)),       # LN gamma
                pl.BlockSpec((1, H), lambda i: (0, 0)),       # LN beta
            ],
            out_specs=pl.BlockSpec((tm_eff, H), lambda i: (i, 0)),
        ),
        compiler_params=pltpu.CompilerParams(
            dimension_semantics=("parallel",),
            vmem_limit_bytes=vmem_limit,
        ),
        cost_estimate=cost,
    )(x2d, w, b2d, g2d, be2d)

    if M_pad != M:
        out2d = out2d[:M]
    return out2d.reshape(B, S, H)


def _reference(hidden_states, w, b, gamma, beta, eps=1e-5):
    h = jnp.einsum("bsh,hk->bsk", hidden_states, w) + b
    h = h * 0.5 * (1.0 + lax.erf(h / math.sqrt(2.0)))
    u = jnp.mean(h, axis=-1, keepdims=True)
    s = jnp.mean((h - u) ** 2, axis=-1, keepdims=True)
    h = (h - u) / jnp.sqrt(s + eps)
    return gamma * h + beta


if __name__ == "__main__":
    B, S, H = 2, 8, 128  # small BERT-ish shapes; H on the lane axis

    key = jax.random.PRNGKey(0)
    kx, kw, kb = jax.random.split(key, 3)

    hidden_states = jax.random.normal(kx, (B, S, H), dtype=jnp.float32)

    # Deterministic synthetic parameters (not a checkpoint).
    # nn.Linear weight is (out, in); we store its transpose (in, out).
    w_out_in = jax.random.normal(kw, (H, H), dtype=jnp.float32) * (1.0 / math.sqrt(H))
    w = w_out_in.T
    b = jax.random.normal(kb, (H,), dtype=jnp.float32) * 0.02
    gamma = jnp.ones((H,), dtype=jnp.float32)   # BertLayerNorm.weight init
    beta = jnp.zeros((H,), dtype=jnp.float32)   # BertLayerNorm.bias init

    out = bert_prediction_head_transform(hidden_states, w, b, gamma, beta)
    out = jax.block_until_ready(out)

    ref = _reference(hidden_states, w, b, gamma, beta)
    assert out.shape == (B, S, H)
    assert jnp.allclose(out, ref, atol=1e-4, rtol=1e-4)

    print("KERNEL_OK")
</pallas_src>

<mosaic_0001>
module attributes {stable_mosaic.version = 11 : i64} {
  func.func @_head_transform_kernel(%arg0: i32, %arg1: memref<128x128xf32, #tpu.memory_space<vmem>>, %arg2: memref<128x128xf32, #tpu.memory_space<vmem>>, %arg3: memref<1x128xf32, #tpu.memory_space<vmem>>, %arg4: memref<1x128xf32, #tpu.memory_space<vmem>>, %arg5: memref<1x128xf32, #tpu.memory_space<vmem>>, %arg6: memref<128x128xf32, #tpu.memory_space<vmem>>) attributes {dimension_semantics = [#tpu.dimension_semantics<parallel>], iteration_bounds = array<i64: 1>, scalar_prefetch = 0 : i64, scratch_operands = 0 : i64, tpu.core_type = #tpu.core_type<tc>, window_params = [{transform_indices = @transform_0, window_bounds = array<i64: 128, 128>}, {pipeline_mode = #tpu.pipeline_mode<synchronous>, transform_indices = @transform_1, window_bounds = array<i64: 128, 128>}, {pipeline_mode = #tpu.pipeline_mode<synchronous>, transform_indices = @transform_2, window_bounds = array<i64: 1, 128>}, {pipeline_mode = #tpu.pipeline_mode<synchronous>, transform_indices = @transform_3, window_bounds = array<i64: 1, 128>}, {pipeline_mode = #tpu.pipeline_mode<synchronous>, transform_indices = @transform_4, window_bounds = array<i64: 1, 128>}, {transform_indices = @transform_5, window_bounds = array<i64: 128, 128>}]} {
    %c0 = arith.constant 0 : index
    %c0_0 = arith.constant 0 : index
    %0 = vector.load %arg1[%c0, %c0_0] : memref<128x128xf32, #tpu.memory_space<vmem>>, vector<128x128xf32>
    %c0_1 = arith.constant 0 : index
    %c0_2 = arith.constant 0 : index
    %1 = vector.load %arg2[%c0_1, %c0_2] : memref<128x128xf32, #tpu.memory_space<vmem>>, vector<128x128xf32>
    %cst = arith.constant dense<0.000000e+00> : vector<128x128xf32>
    %2 = tpu.matmul %0, %1, %cst {dimension_numbers = #tpu.dot_dimension_numbers<[1], [0], [0], [1], [0, 0, 1, 1], [], []>} : vector<128x128xf32>, vector<128x128xf32>, vector<128x128xf32> -> vector<128x128xf32>
    %c0_3 = arith.constant 0 : index
    %c0_4 = arith.constant 0 : index
    %3 = vector.load %arg3[%c0_3, %c0_4] : memref<1x128xf32, #tpu.memory_space<vmem>>, vector<1x128xf32>
    %4 = vector.broadcast %3 : vector<1x128xf32> to vector<128x128xf32>
    %5 = arith.addf %2, %4 : vector<128x128xf32>
    %cst_5 = arith.constant 0.707106769 : f32
    %6 = vector.broadcast %cst_5 : f32 to vector<128x128xf32>
    %7 = arith.mulf %5, %6 : vector<128x128xf32>
    %8 = math.erf %7 : vector<128x128xf32>
    %cst_6 = arith.constant 1.000000e+00 : f32
    %9 = vector.broadcast %cst_6 : f32 to vector<128x128xf32>
    %10 = arith.addf %9, %8 : vector<128x128xf32>
    %cst_7 = arith.constant 5.000000e-01 : f32
    %11 = vector.broadcast %cst_7 : f32 to vector<128x128xf32>
    %12 = arith.mulf %11, %10 : vector<128x128xf32>
    %13 = arith.mulf %5, %12 : vector<128x128xf32>
    %cst_8 = arith.constant dense<0.000000e+00> : vector<128xf32>
    %14 = vector.multi_reduction <add>, %13, %cst_8 [1] : vector<128x128xf32> to vector<128xf32>
    %15 = vector.shape_cast %14 : vector<128xf32> to vector<128x1xf32>
    %cst_9 = arith.constant 1.280000e+02 : f32
    %16 = vector.broadcast %cst_9 : f32 to vector<128x1xf32>
    %17 = arith.divf %15, %16 : vector<128x1xf32>
    %18 = vector.broadcast %17 : vector<128x1xf32> to vector<128x128xf32>
    %19 = arith.subf %13, %18 : vector<128x128xf32>
    %20 = arith.mulf %19, %19 : vector<128x128xf32>
    %cst_10 = arith.constant dense<0.000000e+00> : vector<128xf32>
    %21 = vector.multi_reduction <add>, %20, %cst_10 [1] : vector<128x128xf32> to vector<128xf32>
    %22 = vector.shape_cast %21 : vector<128xf32> to vector<128x1xf32>
    %cst_11 = arith.constant 1.280000e+02 : f32
    %23 = vector.broadcast %cst_11 : f32 to vector<128x1xf32>
    %24 = arith.divf %22, %23 : vector<128x1xf32>
    %cst_12 = arith.constant 9.99999974E-6 : f32
    %25 = vector.broadcast %cst_12 : f32 to vector<128x1xf32>
    %26 = arith.addf %24, %25 : vector<128x1xf32>
    %27 = math.rsqrt %26 : vector<128x1xf32>
    %28 = vector.broadcast %27 : vector<128x1xf32> to vector<128x128xf32>
    %29 = arith.mulf %19, %28 : vector<128x128xf32>
    %c0_13 = arith.constant 0 : index
    %c0_14 = arith.constant 0 : index
    %30 = vector.load %arg4[%c0_13, %c0_14] : memref<1x128xf32, #tpu.memory_space<vmem>>, vector<1x128xf32>
    %31 = vector.broadcast %30 : vector<1x128xf32> to vector<128x128xf32>
    %32 = arith.mulf %29, %31 : vector<128x128xf32>
    %c0_15 = arith.constant 0 : index
    %c0_16 = arith.constant 0 : index
    %33 = vector.load %arg5[%c0_15, %c0_16] : memref<1x128xf32, #tpu.memory_space<vmem>>, vector<1x128xf32>
    %34 = vector.broadcast %33 : vector<1x128xf32> to vector<128x128xf32>
    %35 = arith.addf %32, %34 : vector<128x128xf32>
    %c0_17 = arith.constant 0 : index
    %c0_18 = arith.constant 0 : index
    %36 = vector.load %arg6[%c0_17, %c0_18] : memref<128x128xf32, #tpu.memory_space<vmem>>, vector<128x128xf32>
    tpu.vector_store %arg6[%c0_17, %c0_18], %35 {strides = array<i32>} : memref<128x128xf32, #tpu.memory_space<vmem>>, vector<128x128xf32>,
    return
  }
  func.func @transform_0(%arg0: i32) -> (i32, i32) {
    %c0_i32 = arith.constant 0 : i32
    %c0_i32_0 = arith.constant 0 : i32
    return %arg0, %c0_i32 : i32, i32
  }
  func.func @transform_1(%arg0: i32) -> (i32, i32) {
    %c0_i32 = arith.constant 0 : i32
    %c0_i32_0 = arith.constant 0 : i32
    %c0_i32_1 = arith.constant 0 : i32
    return %c0_i32, %c0_i32_0 : i32, i32
  }
  func.func @transform_2(%arg0: i32) -> (i32, i32) {
    %c0_i32 = arith.constant 0 : i32
    %c0_i32_0 = arith.constant 0 : i32
    %c0_i32_1 = arith.constant 0 : i32
    return %c0_i32, %c0_i32_0 : i32, i32
  }
  func.func @transform_3(%arg0: i32) -> (i32, i32) {
    %c0_i32 = arith.constant 0 : i32
    %c0_i32_0 = arith.constant 0 : i32
    %c0_i32_1 = arith.constant 0 : i32
    return %c0_i32, %c0_i32_0 : i32, i32
  }
  func.func @transform_4(%arg0: i32) -> (i32, i32) {
    %c0_i32 = arith.constant 0 : i32
    %c0_i32_0 = arith.constant 0 : i32
    %c0_i32_1 = arith.constant 0 : i32
    return %c0_i32, %c0_i32_0 : i32, i32
  }
  func.func @transform_5(%arg0: i32) -> (i32, i32) {
    %c0_i32 = arith.constant 0 : i32
    %c0_i32_0 = arith.constant 0 : i32
    return %arg0, %c0_i32 : i32, i32
  }
}

</mosaic_0001>

<llo_original>
// kernel: tpu_custom_call.1
$region0: #{tpu_custom_call.1}
  #allocation0 [shape = 'u32[]', space=smem, size = 0x4, offset = 0x4, fixed_abs, tag = 'smem constant byte address 0x4 - core index']
  #allocation1 [shape = 'u32[144,128]{1,0:T(1,128)}', space=vmem, size = 0x12000, scoped, tag = 'internal scratch']
  %s0 = inlined_call_operand.hbm [shape: f32[128,128], index: 0, kind: input, shape index: {}]
  %s1 = inlined_call_operand.hbm [shape: f32[128,128], index: 1, kind: input, shape index: {}]
  %s2 = inlined_call_operand.vmem [shape: f32[1,128], index: 2, kind: input, shape index: {}]
  %s3 = inlined_call_operand.vmem [shape: f32[1,128], index: 3, kind: input, shape index: {}]
  %s4 = inlined_call_operand.vmem [shape: f32[1,128], index: 4, kind: input, shape index: {}]
  %s5 = inlined_call_operand.hbm [shape: f32[128,128], index: 5, kind: output, shape index: {}]
  %s6 = sld [smem:[#allocation0]]
  $region38: #{tpu_custom_call.1} parent=0
    _
  %s8 = ssub.s32 1, %s6
  %s9 = scalar_select 0, %s8, %s6
  $region1: #{tpu_custom_call.1} parent=0
    #allocation2 [shape = 'u8[65536]{0}', space=vmem, size = 0x10000, scoped, tag = 'input window, operand 0, single buffered']
    #allocation3 [shape = 's32[1]{0}', space=sflag, size = 0x4, scoped, tag = 'scoped memory for tpu_custom_call.1']
    #allocation4 [shape = 's32[1]{0}', space=sflag, size = 0x4, scoped, tag = 'scoped memory for tpu_custom_call.1']
    #allocation5 [shape = 'u8[65536]{0}', space=vmem, size = 0x10000, scoped, tag = 'input window, operand 1, single buffered']
    #allocation6 [shape = 's32[1]{0}', space=sflag, size = 0x4, scoped, tag = 'scoped memory for tpu_custom_call.1']
    #allocation7 [shape = 'u8[65536]{0}', space=vmem, size = 0x10000, scoped, tag = 'output window, operand 0, single buffered']
    %10 = vsyncpa [#allocation3], 0
    %11 = vsyncpa [#allocation6], 0
    %12 = vsyncpa [#allocation4], 0
    // Predicated region
    $region2: #{tpu_custom_call.1} parent=1 // pred_check
      _
    $region3: #{tpu_custom_call.1} parent=1 // pred_check_branch
      %14 = sbr.rel (0) target = $region5
    $region4: #{tpu_custom_call.1} parent=1 // pred_region
      %s16 = ssub.s32 2048, 2048
      %17 = vsyncadd [#allocation3], %s16
      %s18 = sshll.u32 [#allocation2], 4
      %s19 = int_to_ptr.vmem [resolvable:$true] %s18
      %24 = dma.hbm_to_vmem [thread:$0]  %s0, 2048, %s19, [#allocation3], 128, 128, 8
    $region5: #{tpu_custom_call.1} parent=1 // pred_fallthru
      _
    // Predicated region
    $region6: #{tpu_custom_call.1} parent=1 // pred_check
      _
    $region7: #{tpu_custom_call.1} parent=1 // pred_check_branch
      %26 = sbr.rel (0) target = $region9
    $region8: #{tpu_custom_call.1} parent=1 // pred_region
      %s28 = ssub.s32 2048, 2048
      %29 = vsyncadd [#allocation6], %s28
      %s30 = sshll.u32 [#allocation5], 4
      %s31 = int_to_ptr.vmem [resolvable:$true] %s30
      %36 = dma.hbm_to_vmem [thread:$0]  %s1, 2048, %s31, [#allocation6], 128, 128, 8
    $region9: #{tpu_custom_call.1} parent=1 // pred_fallthru
      _
    // Predicated region
    $region10: #{tpu_custom_call.1} parent=1 // pred_check
      _
    $region11: #{tpu_custom_call.1} parent=1 // pred_check_branch
      %38 = sbr.rel (0) target = $region13
    $region12: #{tpu_custom_call.1} parent=1 // pred_region
      _
    $region13: #{tpu_custom_call.1} parent=1 // pred_fallthru
      _
    // Predicated region
    $region14: #{tpu_custom_call.1} parent=1 // pred_check
      _
    $region15: #{tpu_custom_call.1} parent=1 // pred_check_branch
      %40 = sbr.rel (0) target = $region17
    $region16: #{tpu_custom_call.1} parent=1 // pred_region
      _
    $region17: #{tpu_custom_call.1} parent=1 // pred_fallthru
      _
    // Predicated region
    $region18: #{tpu_custom_call.1} parent=1 // pred_check
      _
    $region19: #{tpu_custom_call.1} parent=1 // pred_check_branch
      %42 = sbr.rel (0) target = $region21
    $region20: #{tpu_custom_call.1} parent=1 // pred_region
      _
    $region21: #{tpu_custom_call.1} parent=1 // pred_fallthru
      _
    // Predicated region
    $region22: #{tpu_custom_call.1} parent=1 // pred_check
      _
    $region23: #{tpu_custom_call.1} parent=1 // pred_check_branch
      %44 = sbr.rel (0) target = $region25
    $region24: #{tpu_custom_call.1} parent=1 // pred_region
      %45 = dma.done [#allocation3], 2048
    $region25: #{tpu_custom_call.1} parent=1 // pred_fallthru
      _
    // Predicated region
    $region26: #{tpu_custom_call.1} parent=1 // pred_check
      _
    $region27: #{tpu_custom_call.1} parent=1 // pred_check_branch
      %47 = sbr.rel (0) target = $region29
    $region28: #{tpu_custom_call.1} parent=1 // pred_region
      %48 = dma.done [#allocation6], 2048
    $region29: #{tpu_custom_call.1} parent=1 // pred_fallthru
      _
    %v49 = vld [vmem:[#allocation2] sm:$0xff]
    %v50 = vld [vmem:[#allocation2 + $0x8] sm:$0xff]
    %v51 = vld [vmem:[#allocation2 + $0x10] sm:$0xff]
    %v52 = vld [vmem:[#allocation2 + $0x18] sm:$0xff]
    %v53 = vld [vmem:[#allocation2 + $0x20] sm:$0xff]
    %v54 = vld [vmem:[#allocation2 + $0x28] sm:$0xff]
    %v55 = vld [vmem:[#allocation2 + $0x30] sm:$0xff]
    %v56 = vld [vmem:[#allocation2 + $0x38] sm:$0xff]
    %v57 = vld [vmem:[#allocation2 + $0x40] sm:$0xff]
    %v58 = vld [vmem:[#allocation2 + $0x48] sm:$0xff]
    %v59 = vld [vmem:[#allocation2 + $0x50] sm:$0xff]
    %v60 = vld [vmem:[#allocation2 + $0x58] sm:$0xff]
    %v61 = vld [vmem:[#allocation2 + $0x60] sm:$0xff]
    %v62 = vld [vmem:[#allocation2 + $0x68] sm:$0xff]
    %v63 = vld [vmem:[#allocation2 + $0x70] sm:$0xff]
    %v64 = vld [vmem:[#allocation2 + $0x78] sm:$0xff]
    %v65 = vld [vmem:[#allocation5] sm:$0xff]
    %v66 = vld [vmem:[#allocation5 + $0x8] sm:$0xff]
    %v67 = vld [vmem:[#allocation5 + $0x10] sm:$0xff]
    %v68 = vld [vmem:[#allocation5 + $0x18] sm:$0xff]
    %v69 = vld [vmem:[#allocation5 + $0x20] sm:$0xff]
    %v70 = vld [vmem:[#allocation5 + $0x28] sm:$0xff]
    %v71 = vld [vmem:[#allocation5 + $0x30] sm:$0xff]
    %v72 = vld [vmem:[#allocation5 + $0x38] sm:$0xff]
    %v73 = vld [vmem:[#allocation5 + $0x40] sm:$0xff]
    %v74 = vld [vmem:[#allocation5 + $0x48] sm:$0xff]
    %v75 = vld [vmem:[#allocation5 + $0x50] sm:$0xff]
    %v76 = vld [vmem:[#allocation5 + $0x58] sm:$0xff]
    %v77 = vld [vmem:[#allocation5 + $0x60] sm:$0xff]
    %v78 = vld [vmem:[#allocation5 + $0x68] sm:$0xff]
    %v79 = vld [vmem:[#allocation5 + $0x70] sm:$0xff]
    %v80 = vld [vmem:[#allocation5 + $0x78] sm:$0xff]
    %v81 = vld [vmem:[%s2] sm:$0x1]
    %v83 = vlaneseq
    %v84 = vshrl.u32 %v83, 7
    %v85 = vsub.s32 0, %v84
    %v86 = vrot.slane %v81, %v85
    %88 = vmatprep.subr.mxu0 0.0
    %89 = vmatpush1.msra.mxu0 %v65
    %90 = vmatprep.subr.mxu0 0.0
    %91 = vmatpush1.msra.mxu0 %v66
    %92 = vmatprep.subr.mxu0 0.0
    %93 = vmatpush1.msra.mxu0 %v67
    %94 = vmatprep.subr.mxu0 0.0
    %95 = vmatpush1.msra.mxu0 %v68
    %96 = vmatprep.subr.mxu0 0.0
    %97 = vmatpush1.msra.mxu0 %v69
    %98 = vmatprep.subr.mxu0 0.0
    %99 = vmatpush1.msra.mxu0 %v70
    %100 = vmatprep.subr.mxu0 0.0
    %101 = vmatpush1.msra.mxu0 %v71
    %102 = vmatprep.subr.mxu0 0.0
    %103 = vmatpush1.msra.mxu0 %v72
    %104 = vmatprep.subr.mxu0 0.0
    %105 = vmatpush1.msra.mxu0 %v73
    %106 = vmatprep.subr.mxu0 0.0
    %107 = vmatpush1.msra.mxu0 %v74
    %108 = vmatprep.subr.mxu0 0.0
    %109 = vmatpush1.msra.mxu0 %v75
    %110 = vmatprep.subr.mxu0 0.0
    %111 = vmatpush1.msra.mxu0 %v76
    %112 = vmatprep.subr.mxu0 0.0
    %113 = vmatpush1.msra.mxu0 %v77
    %114 = vmatprep.subr.mxu0 0.0
    %115 = vmatpush1.msra.mxu0 %v78
    %116 = vmatprep.subr.mxu0 0.0
    %117 = vmatpush1.msra.mxu0 %v79
    %118 = vmatprep.subr.mxu0 0.0
    %119 = vmatpush1.msra.mxu0 %v80
    %120 = vmatprep.subr.mxu0 0.0
    %121 = vmatpush1.msra.mxu0 0.0
    %122 = vmatprep.subr.mxu0 0.0
    %123 = vmatpush1.msra.mxu0 0.0
    %124 = vmatprep.subr.mxu0 0.0
    %125 = vmatpush1.msra.mxu0 0.0
    %126 = vmatprep.subr.mxu0 0.0
    %127 = vmatpush1.msra.mxu0 0.0
    %128 = vmatprep.subr.mxu0 0.0
    %129 = vmatpush1.msra.mxu0 0.0
    %130 = vmatprep.subr.mxu0 0.0
    %131 = vmatpush1.msra.mxu0 0.0
    %132 = vmatprep.subr.mxu0 0.0
    %133 = vmatpush1.msra.mxu0 0.0
    %134 = vmatprep.subr.mxu0 0.0
    %135 = vmatpush1.msra.mxu0 0.0
    %136 = vmatprep.subr.mxu0 0.0
    %137 = vmatpush1.msra.mxu0 0.0
    %138 = vmatprep.subr.mxu0 0.0
    %139 = vmatpush1.msra.mxu0 0.0
    %140 = vmatprep.subr.mxu0 0.0
    %141 = vmatpush1.msra.mxu0 0.0
    %142 = vmatprep.subr.mxu0 0.0
    %143 = vmatpush1.msra.mxu0 0.0
    %144 = vmatprep.subr.mxu0 0.0
    %145 = vmatpush1.msra.mxu0 0.0
    %146 = vmatprep.subr.mxu0 0.0
    %147 = vmatpush1.msra.mxu0 0.0
    %148 = vmatprep.subr.mxu0 0.0
    %149 = vmatpush1.msra.mxu0 0.0
    %150 = vmatprep.subr.mxu0 0.0
    %151 = vmatpush1.msra.mxu0 0.0
    %152 = vmatprep.mubr.f32.mxu0 0.0
    %153 = vmatmul.mubr.f32.gmra.mrb[0].mxu0 %v49
    %v154 = vpop.f32.mrb[0].mxu0
    %v155 = vadd.f32 %v86, %v154
    %v156 = vpop.f32.mrb[0].mxu0
    %157 = vmatprep.mubr.f32.mxu0 0.0
    %158 = vmatmul.mubr.f32.gmra.mrb[0].mxu0 %v50
    %v159 = vpop.f32.mrb[0].mxu0
    %v160 = vadd.f32 %v86, %v159
    %v161 = vpop.f32.mrb[0].mxu0
    %162 = vmatprep.mubr.f32.mxu0 0.0
    %163 = vmatmul.mubr.f32.gmra.mrb[0].mxu0 %v51
    %v164 = vpop.f32.mrb[0].mxu0
    %v165 = vadd.f32 %v86, %v164
    %v166 = vpop.f32.mrb[0].mxu0
    %167 = vmatprep.mubr.f32.mxu0 0.0
    %168 = vmatmul.mubr.f32.gmra.mrb[0].mxu0 %v52
    %v169 = vpop.f32.mrb[0].mxu0
    %v170 = vadd.f32 %v86, %v169
    %v171 = vpop.f32.mrb[0].mxu0
    %172 = vmatprep.mubr.f32.mxu0 0.0
    %173 = vmatmul.mubr.f32.gmra.mrb[0].mxu0 %v53
    %v174 = vpop.f32.mrb[0].mxu0
    %v175 = vadd.f32 %v86, %v174
    %v176 = vpop.f32.mrb[0].mxu0
    %177 = vmatprep.mubr.f32.mxu0 0.0
    %178 = vmatmul.mubr.f32.gmra.mrb[0].mxu0 %v54
    %v179 = vpop.f32.mrb[0].mxu0
    %v180 = vadd.f32 %v86, %v179
    %v181 = vpop.f32.mrb[0].mxu0
    %182 = vmatprep.mubr.f32.mxu0 0.0
    %183 = vmatmul.mubr.f32.gmra.mrb[0].mxu0 %v55
    %v184 = vpop.f32.mrb[0].mxu0
    %v185 = vadd.f32 %v86, %v184
    %v186 = vpop.f32.mrb[0].mxu0
    %187 = vmatprep.mubr.f32.mxu0 0.0
    %188 = vmatmul.mubr.f32.gmra.mrb[0].mxu0 %v56
    %v189 = vpop.f32.mrb[0].mxu0
    %v190 = vadd.f32 %v86, %v189
    %v191 = vpop.f32.mrb[0].mxu0
    %192 = vmatprep.mubr.f32.mxu0 0.0
    %193 = vmatmul.mubr.f32.gmra.mrb[0].mxu0 %v57
    %v194 = vpop.f32.mrb[0].mxu0
    %v195 = vadd.f32 %v86, %v194
    %v196 = vpop.f32.mrb[0].mxu0
    %197 = vmatprep.mubr.f32.mxu0 0.0
    %198 = vmatmul.mubr.f32.gmra.mrb[0].mxu0 %v58
    %v199 = vpop.f32.mrb[0].mxu0
    %v200 = vadd.f32 %v86, %v199
    %v201 = vpop.f32.mrb[0].mxu0
    %202 = vmatprep.mubr.f32.mxu0 0.0
    %203 = vmatmul.mubr.f32.gmra.mrb[0].mxu0 %v59
    %v204 = vpop.f32.mrb[0].mxu0
    %v205 = vadd.f32 %v86, %v204
    %v206 = vpop.f32.mrb[0].mxu0
    %207 = vmatprep.mubr.f32.mxu0 0.0
    %208 = vmatmul.mubr.f32.gmra.mrb[0].mxu0 %v60
    %v209 = vpop.f32.mrb[0].mxu0
    %v210 = vadd.f32 %v86, %v209
    %v211 = vpop.f32.mrb[0].mxu0
    %212 = vmatprep.mubr.f32.mxu0 0.0
    %213 = vmatmul.mubr.f32.gmra.mrb[0].mxu0 %v61
    %v214 = vpop.f32.mrb[0].mxu0
    %v215 = vadd.f32 %v86, %v214
    %v216 = vpop.f32.mrb[0].mxu0
    %217 = vmatprep.mubr.f32.mxu0 0.0
    %218 = vmatmul.mubr.f32.gmra.mrb[0].mxu0 %v62
    %v219 = vpop.f32.mrb[0].mxu0
    %v220 = vadd.f32 %v86, %v219
    %v221 = vpop.f32.mrb[0].mxu0
    %222 = vmatprep.mubr.f32.mxu0 0.0
    %223 = vmatmul.mubr.f32.gmra.mrb[0].mxu0 %v63
    %v224 = vpop.f32.mrb[0].mxu0
    %v225 = vadd.f32 %v86, %v224
    %v226 = vpop.f32.mrb[0].mxu0
    %227 = vmatprep.mubr.f32.mxu0 0.0
    %228 = vmatmul.mubr.f32.gmra.mrb[0].mxu0 %v64
    %v229 = vpop.f32.mrb[0].mxu0
    %v230 = vadd.f32 %v86, %v229
    %v231 = vpop.f32.mrb[0].mxu0
    %232 = vdwg.mxu0
    %v233 = vmul.f32 %v155, 0.70710677
    %v234 = vmul.f32 %v160, 0.70710677
    %v235 = vmul.f32 %v165, 0.70710677
    %v236 = vmul.f32 %v170, 0.70710677
    %v237 = vmul.f32 %v175, 0.70710677
    %v238 = vmul.f32 %v180, 0.70710677
    %v239 = vmul.f32 %v185, 0.70710677
    %v240 = vmul.f32 %v190, 0.70710677
    %v241 = vmul.f32 %v195, 0.70710677
    %v242 = vmul.f32 %v200, 0.70710677
    %v243 = vmul.f32 %v205, 0.70710677
    %v244 = vmul.f32 %v210, 0.70710677
    %v245 = vmul.f32 %v215, 0.70710677
    %v246 = vmul.f32 %v220, 0.70710677
    %v247 = vmul.f32 %v225, 0.70710677
    %v248 = vmul.f32 %v230, 0.70710677
    %v249 = verf.f32.pop %v233
    %v250 = verf.f32.pop %v234
    %v251 = verf.f32.pop %v235
    %v252 = verf.f32.pop %v236
    %v253 = verf.f32.pop %v237
    %v254 = verf.f32.pop %v238
    %v255 = verf.f32.pop %v239
    %v256 = verf.f32.pop %v240
    %v257 = verf.f32.pop %v241
    %v258 = verf.f32.pop %v242
    %v259 = verf.f32.pop %v243
    %v260 = verf.f32.pop %v244
    %v261 = verf.f32.pop %v245
    %v262 = verf.f32.pop %v246
    %v263 = verf.f32.pop %v247
    %v264 = verf.f32.pop %v248
    %v265 = vadd.f32 %v249, 1.0
    %v266 = vadd.f32 %v250, 1.0
    %v267 = vadd.f32 %v251, 1.0
    %v268 = vadd.f32 %v252, 1.0
    %v269 = vadd.f32 %v253, 1.0
    %v270 = vadd.f32 %v254, 1.0
    %v271 = vadd.f32 %v255, 1.0
    %v272 = vadd.f32 %v256, 1.0
    %v273 = vadd.f32 %v257, 1.0
    %v274 = vadd.f32 %v258, 1.0
    %v275 = vadd.f32 %v259, 1.0
    %v276 = vadd.f32 %v260, 1.0
    %v277 = vadd.f32 %v261, 1.0
    %v278 = vadd.f32 %v262, 1.0
    %v279 = vadd.f32 %v263, 1.0
    %v280 = vadd.f32 %v264, 1.0
    %v281 = vmul.f32 %v265, 0.5
    %v282 = vmul.f32 %v266, 0.5
    %v283 = vmul.f32 %v267, 0.5
    %v284 = vmul.f32 %v268, 0.5
    %v285 = vmul.f32 %v269, 0.5
    %v286 = vmul.f32 %v270, 0.5
    %v287 = vmul.f32 %v271, 0.5
    %v288 = vmul.f32 %v272, 0.5
    %v289 = vmul.f32 %v273, 0.5
    %v290 = vmul.f32 %v274, 0.5
    %v291 = vmul.f32 %v275, 0.5
    %v292 = vmul.f32 %v276, 0.5
    %v293 = vmul.f32 %v277, 0.5
    %v294 = vmul.f32 %v278, 0.5
    %v295 = vmul.f32 %v279, 0.5
    %v296 = vmul.f32 %v280, 0.5
    %v297 = vmul.f32 %v155, %v281
    %v298 = vmul.f32 %v160, %v282
    %v299 = vmul.f32 %v165, %v283
    %v300 = vmul.f32 %v170, %v284
    %v301 = vmul.f32 %v175, %v285
    %v302 = vmul.f32 %v180, %v286
    %v303 = vmul.f32 %v185, %v287
    %v304 = vmul.f32 %v190, %v288
    %v305 = vmul.f32 %v195, %v289
    %v306 = vmul.f32 %v200, %v290
    %v307 = vmul.f32 %v205, %v291
    %v308 = vmul.f32 %v210, %v292
    %v309 = vmul.f32 %v215, %v293
    %v310 = vmul.f32 %v220, %v294
    %v311 = vmul.f32 %v225, %v295
    %v312 = vmul.f32 %v230, %v296
    %313 = vadd.xlane.f32.xlu0 %v297
    %v314 = vpop.xlane.xlu0 %313
    %315 = vadd.xlane.f32.xlu0 %v298
    %v316 = vpop.xlane.xlu0 %315
    %317 = vadd.xlane.f32.xlu0 %v299
    %v318 = vpop.xlane.xlu0 %317
    %319 = vadd.xlane.f32.xlu0 %v300
    %v320 = vpop.xlane.xlu0 %319
    %321 = vadd.xlane.f32.xlu0 %v301
    %v322 = vpop.xlane.xlu0 %321
    %323 = vadd.xlane.f32.xlu0 %v302
    %v324 = vpop.xlane.xlu0 %323
    %325 = vadd.xlane.f32.xlu0 %v303
    %v326 = vpop.xlane.xlu0 %325
    %327 = vadd.xlane.f32.xlu0 %v304
    %v328 = vpop.xlane.xlu0 %327
    %329 = vadd.xlane.f32.xlu0 %v305
    %v330 = vpop.xlane.xlu0 %329
    %331 = vadd.xlane.f32.xlu0 %v306
    %v332 = vpop.xlane.xlu0 %331
    %333 = vadd.xlane.f32.xlu0 %v307
    %v334 = vpop.xlane.xlu0 %333
    %335 = vadd.xlane.f32.xlu0 %v308
    %v336 = vpop.xlane.xlu0 %335
    %337 = vadd.xlane.f32.xlu0 %v309
    %v338 = vpop.xlane.xlu0 %337
    %339 = vadd.xlane.f32.xlu0 %v310
    %v340 = vpop.xlane.xlu0 %339
    %341 = vadd.xlane.f32.xlu0 %v311
    %v342 = vpop.xlane.xlu0 %341
    %343 = vadd.xlane.f32.xlu0 %v312
    %v344 = vpop.xlane.xlu0 %343
    %v345 = vrcp.pop 128.0
    %v346 = vmul.f32 %v314, %v345
    %v347 = vmul.f32 %v316, %v345
    %v348 = vmul.f32 %v318, %v345
    %v349 = vmul.f32 %v320, %v345
    %v350 = vmul.f32 %v322, %v345
    %v351 = vmul.f32 %v324, %v345
    %v352 = vmul.f32 %v326, %v345
    %v353 = vmul.f32 %v328, %v345
    %v354 = vmul.f32 %v330, %v345
    %v355 = vmul.f32 %v332, %v345
    %v356 = vmul.f32 %v334, %v345
    %v357 = vmul.f32 %v336, %v345
    %v358 = vmul.f32 %v338, %v345
    %v359 = vmul.f32 %v340, %v345
    %v360 = vmul.f32 %v342, %v345
    %v361 = vmul.f32 %v344, %v345
    %v362 = vsub.f32 %v297, %v346
    %v363 = vsub.f32 %v298, %v347
    %v364 = vsub.f32 %v299, %v348
    %v365 = vsub.f32 %v300, %v349
    %v366 = vsub.f32 %v301, %v350
    %v367 = vsub.f32 %v302, %v351
    %v368 = vsub.f32 %v303, %v352
    %v369 = vsub.f32 %v304, %v353
    %v370 = vsub.f32 %v305, %v354
    %v371 = vsub.f32 %v306, %v355
    %v372 = vsub.f32 %v307, %v356
    %v373 = vsub.f32 %v308, %v357
    %v374 = vsub.f32 %v309, %v358
    %v375 = vsub.f32 %v310, %v359
    %v376 = vsub.f32 %v311, %v360
    %v377 = vsub.f32 %v312, %v361
    %v378 = vmul.f32 %v362, %v362
    %v379 = vmul.f32 %v363, %v363
    %v380 = vmul.f32 %v364, %v364
    %v381 = vmul.f32 %v365, %v365
    %v382 = vmul.f32 %v366, %v366
    %v383 = vmul.f32 %v367, %v367
    %v384 = vmul.f32 %v368, %v368
    %v385 = vmul.f32 %v369, %v369
    %v386 = vmul.f32 %v370, %v370
    %v387 = vmul.f32 %v371, %v371
    %v388 = vmul.f32 %v372, %v372
    %v389 = vmul.f32 %v373, %v373
    %v390 = vmul.f32 %v374, %v374
    %v391 = vmul.f32 %v375, %v375
    %v392 = vmul.f32 %v376, %v376
    %v393 = vmul.f32 %v377, %v377
    %394 = vadd.xlane.f32.xlu0 %v378
    %v395 = vpop.xlane.xlu0 %394
    %396 = vadd.xlane.f32.xlu0 %v379
    %v397 = vpop.xlane.xlu0 %396
    %398 = vadd.xlane.f32.xlu0 %v380
    %v399 = vpop.xlane.xlu0 %398
    %400 = vadd.xlane.f32.xlu0 %v381
    %v401 = vpop.xlane.xlu0 %400
    %402 = vadd.xlane.f32.xlu0 %v382
    %v403 = vpop.xlane.xlu0 %402
    %404 = vadd.xlane.f32.xlu0 %v383
    %v405 = vpop.xlane.xlu0 %404
    %406 = vadd.xlane.f32.xlu0 %v384
    %v407 = vpop.xlane.xlu0 %406
    %408 = vadd.xlane.f32.xlu0 %v385
    %v409 = vpop.xlane.xlu0 %408
    %410 = vadd.xlane.f32.xlu0 %v386
    %v411 = vpop.xlane.xlu0 %410
    %412 = vadd.xlane.f32.xlu0 %v387
    %v413 = vpop.xlane.xlu0 %412
    %414 = vadd.xlane.f32.xlu0 %v388
    %v415 = vpop.xlane.xlu0 %414
    %416 = vadd.xlane.f32.xlu0 %v389
    %v417 = vpop.xlane.xlu0 %416
    %418 = vadd.xlane.f32.xlu0 %v390
    %v419 = vpop.xlane.xlu0 %418
    %420 = vadd.xlane.f32.xlu0 %v391
    %v421 = vpop.xlane.xlu0 %420
    %422 = vadd.xlane.f32.xlu0 %v392
    %v423 = vpop.xlane.xlu0 %422
    %424 = vadd.xlane.f32.xlu0 %v393
    %v425 = vpop.xlane.xlu0 %424
    %v426 = vmul.f32 %v395, %v345
    %v427 = vmul.f32 %v397, %v345
    %v428 = vmul.f32 %v399, %v345
    %v429 = vmul.f32 %v401, %v345
    %v430 = vmul.f32 %v403, %v345
    %v431 = vmul.f32 %v405, %v345
    %v432 = vmul.f32 %v407, %v345
    %v433 = vmul.f32 %v409, %v345
    %v434 = vmul.f32 %v411, %v345
    %v435 = vmul.f32 %v413, %v345
    %v436 = vmul.f32 %v415, %v345
    %v437 = vmul.f32 %v417, %v345
    %v438 = vmul.f32 %v419, %v345
    %v439 = vmul.f32 %v421, %v345
    %v440 = vmul.f32 %v423, %v345
    %v441 = vmul.f32 %v425, %v345
    %v442 = vadd.f32 %v426, 1e-05
    %v443 = vadd.f32 %v427, 1e-05
    %v444 = vadd.f32 %v428, 1e-05
    %v445 = vadd.f32 %v429, 1e-05
    %v446 = vadd.f32 %v430, 1e-05
    %v447 = vadd.f32 %v431, 1e-05
    %v448 = vadd.f32 %v432, 1e-05
    %v449 = vadd.f32 %v433, 1e-05
    %v450 = vadd.f32 %v434, 1e-05
    %v451 = vadd.f32 %v435, 1e-05
    %v452 = vadd.f32 %v436, 1e-05
    %v453 = vadd.f32 %v437, 1e-05
    %v454 = vadd.f32 %v438, 1e-05
    %v455 = vadd.f32 %v439, 1e-05
    %v456 = vadd.f32 %v440, 1e-05
    %v457 = vadd.f32 %v441, 1e-05
    %v458 = vrsqrt.pop %v442
    %v459 = vrsqrt.pop %v443
    %v460 = vrsqrt.pop %v444
    %v461 = vrsqrt.pop %v445
    %v462 = vrsqrt.pop %v446
    %v463 = vrsqrt.pop %v447
    %v464 = vrsqrt.pop %v448
    %v465 = vrsqrt.pop %v449
    %v466 = vrsqrt.pop %v450
    %v467 = vrsqrt.pop %v451
    %v468 = vrsqrt.pop %v452
    %v469 = vrsqrt.pop %v453
    %v470 = vrsqrt.pop %v454
    %v471 = vrsqrt.pop %v455
    %v472 = vrsqrt.pop %v456
    %v473 = vrsqrt.pop %v457
    %v474 = vmul.f32 %v362, %v458
    %v475 = vmul.f32 %v363, %v459
    %v476 = vmul.f32 %v364, %v460
    %v477 = vmul.f32 %v365, %v461
    %v478 = vmul.f32 %v366, %v462
    %v479 = vmul.f32 %v367, %v463
    %v480 = vmul.f32 %v368, %v464
    %v481 = vmul.f32 %v369, %v465
    %v482 = vmul.f32 %v370, %v466
    %v483 = vmul.f32 %v371, %v467
    %v484 = vmul.f32 %v372, %v468
    %v485 = vmul.f32 %v373, %v469
    %v486 = vmul.f32 %v374, %v470
    %v487 = vmul.f32 %v375, %v471
    %v488 = vmul.f32 %v376, %v472
    %v489 = vmul.f32 %v377, %v473
    %v490 = vld [vmem:[%s3] sm:$0x1]
    %v492 = vlaneseq
    %v493 = vshrl.u32 %v492, 7
    %v494 = vsub.s32 0, %v493
    %v495 = vrot.slane %v490, %v494
    %v497 = vmul.f32 %v474, %v495
    %v498 = vmul.f32 %v475, %v495
    %v499 = vmul.f32 %v476, %v495
    %v500 = vmul.f32 %v477, %v495
    %v501 = vmul.f32 %v478, %v495
    %v502 = vmul.f32 %v479, %v495
    %v503 = vmul.f32 %v480, %v495
    %v504 = vmul.f32 %v481, %v495
    %v505 = vmul.f32 %v482, %v495
    %v506 = vmul.f32 %v483, %v495
    %v507 = vmul.f32 %v484, %v495
    %v508 = vmul.f32 %v485, %v495
    %v509 = vmul.f32 %v486, %v495
    %v510 = vmul.f32 %v487, %v495
    %v511 = vmul.f32 %v488, %v495
    %v512 = vmul.f32 %v489, %v495
    %v513 = vld [vmem:[%s4] sm:$0x1]
    %v515 = vlaneseq
    %v516 = vshrl.u32 %v515, 7
    %v517 = vsub.s32 0, %v516
    %v518 = vrot.slane %v513, %v517
    %v520 = vadd.f32 %v497, %v518
    %v521 = vadd.f32 %v498, %v518
    %v522 = vadd.f32 %v499, %v518
    %v523 = vadd.f32 %v500, %v518
    %v524 = vadd.f32 %v501, %v518
    %v525 = vadd.f32 %v502, %v518
    %v526 = vadd.f32 %v503, %v518
    %v527 = vadd.f32 %v504, %v518
    %v528 = vadd.f32 %v505, %v518
    %v529 = vadd.f32 %v506, %v518
    %v530 = vadd.f32 %v507, %v518
    %v531 = vadd.f32 %v508, %v518
    %v532 = vadd.f32 %v509, %v518
    %v533 = vadd.f32 %v510, %v518
    %v534 = vadd.f32 %v511, %v518
    %v535 = vadd.f32 %v512, %v518
    %536 = vst [vmem:[#allocation7] sm:$0xff] %v520
    %537 = vst [vmem:[#allocation7 + $0x8] sm:$0xff] %v521
    %538 = vst [vmem:[#allocation7 + $0x10] sm:$0xff] %v522
    %539 = vst [vmem:[#allocation7 + $0x18] sm:$0xff] %v523
    %540 = vst [vmem:[#allocation7 + $0x20] sm:$0xff] %v524
    %541 = vst [vmem:[#allocation7 + $0x28] sm:$0xff] %v525
    %542 = vst [vmem:[#allocation7 + $0x30] sm:$0xff] %v526
    %543 = vst [vmem:[#allocation7 + $0x38] sm:$0xff] %v527
    %544 = vst [vmem:[#allocation7 + $0x40] sm:$0xff] %v528
    %545 = vst [vmem:[#allocation7 + $0x48] sm:$0xff] %v529
    %546 = vst [vmem:[#allocation7 + $0x50] sm:$0xff] %v530
    %547 = vst [vmem:[#allocation7 + $0x58] sm:$0xff] %v531
    %548 = vst [vmem:[#allocation7 + $0x60] sm:$0xff] %v532
    %549 = vst [vmem:[#allocation7 + $0x68] sm:$0xff] %v533
    %550 = vst [vmem:[#allocation7 + $0x70] sm:$0xff] %v534
    %551 = vst [vmem:[#allocation7 + $0x78] sm:$0xff] %v535
    // Predicated region
    $region30: #{tpu_custom_call.1} parent=1 // pred_check
      _
    $region31: #{tpu_custom_call.1} parent=1 // pred_check_branch
      %553 = sbr.rel (0) target = $region33
    $region32: #{tpu_custom_call.1} parent=1 // pred_region
      %s555 = ssub.s32 2048, 2048
      %556 = vsyncadd [#allocation4], %s555
      %s557 = sshll.u32 [#allocation7], 4
      %s558 = int_to_ptr.vmem [resolvable:$true] %s557
      %563 = dma.vmem_to_hbm [thread:$0]  %s558, 2048, %s5, [#allocation4], 128, 128, 8
    $region33: #{tpu_custom_call.1} parent=1 // pred_fallthru
      _
    // Predicated region
    $region34: #{tpu_custom_call.1} parent=1 // pred_check
      _
    $region35: #{tpu_custom_call.1} parent=1 // pred_check_branch
      %565 = sbr.rel (0) target = $region37
    $region36: #{tpu_custom_call.1} parent=1 // pred_region
      %566 = dma.done [#allocation4], 2048
    $region37: #{tpu_custom_call.1} parent=1 // pred_fallthru
      _
    %567 = vsyncpa [#allocation3], 1
    %568 = vsyncpa [#allocation6], 1
    %569 = vsyncpa [#allocation4], 1

</llo_original>
